<compile_context>
chip_gen: v7x
topology: tpu7x:2x2x1
jax: 0.10.0
libtpu: 0.0.40
codegen_flags: <defaults>
</compile_context>

<pallas_src>
import jax
import jax.numpy as jnp
from jax.experimental import pallas as pl
from jax.experimental.pallas import tpu as pltpu


def propensity_kernel(x_ref, w_ref, b_ref, o_ref):
    # x: (TILE, K) streamed batch tile, w: (K, F) VMEM-resident, b: (1,) SMEM,
    # o: (TILE, F). x as LHS -> no per-tile transpose of the big operand.
    acc = jnp.dot(x_ref[...], w_ref[...], preferred_element_type=jnp.float32)
    o_ref[...] = (acc + b_ref[0]).astype(o_ref.dtype)


def _choose_tile(rows, row_bytes, target_bytes=2 * 1024 * 1024):
    """~2 MiB streamed blocks (85%+ of HBM roofline), multiple of 1024 rows,
    clamped to [1024, 32768]. If the whole batch fits in one tile, use a single
    full-extent block (block shape == array shape is always legal)."""
    tile = max(1024, min(32768, (target_bytes // max(row_bytes, 1)) // 1024 * 1024))
    if tile >= rows:
        return rows, 1
    return tile, pl.cdiv(rows, tile)


@jax.jit
def propensity_forward(emb, weight, bias):
    """emb: (B, H); weight: (1, H) (torch nn.Linear layout); bias: (1,).
    Returns (B, 1) float32 == emb @ weight.T + bias."""
    B, H = emb.shape
    out_dtype = jnp.float32  # explicit: match torch.nn.Linear-in-f32 semantics

    # Fold small H into the 128-lane axis (free reshape on contiguous emb).
    fold = 128 // H if (H < 128 and 128 % H == 0) else 1
    if fold > 1 and B % fold != 0:
        fold = 1  # reshape would not be metadata-only; use the plain layout

    if fold > 1:
        rows, K = B // fold, fold * H
        x = emb.reshape(rows, K)
        # Block-diagonal weight: w_bd[j*H + h, j2] = W[h] * (j == j2)
        w = (jnp.eye(fold, dtype=emb.dtype)[:, None, :]
             * weight.reshape(1, H, 1).astype(emb.dtype)).reshape(K, fold)
    else:
        rows, K = B, H
        x = emb
        w = weight.reshape(H, 1).astype(emb.dtype)
    F = w.shape[1]

    tile, num_tiles = _choose_tile(rows, K * x.dtype.itemsize)

    out = pl.pallas_call(
        propensity_kernel,
        out_shape=jax.ShapeDtypeStruct((rows, F), out_dtype),
        grid=(num_tiles,),
        in_specs=[
            pl.BlockSpec((tile, K), lambda i: (i, 0)),          # streamed batch tile
            pl.BlockSpec((K, F), lambda i: (0, 0)),             # VMEM-resident weight
            pl.BlockSpec(memory_space=pltpu.MemorySpace.SMEM),  # scalar bias in SMEM
        ],
        out_specs=pl.BlockSpec((tile, F), lambda i: (i, 0)),
        compiler_params=pltpu.CompilerParams(
            dimension_semantics=("parallel",),   # megacore split on v7x
            vmem_limit_bytes=32 * 1024 * 1024,
        ),
        cost_estimate=pl.CostEstimate(
            flops=2 * rows * K * F,
            transcendentals=0,
            bytes_accessed=(rows * K * x.dtype.itemsize
                            + rows * F * jnp.dtype(out_dtype).itemsize
                            + K * F * x.dtype.itemsize),
        ),
    )(x, w, bias.astype(jnp.float32))

    # Row-major (rows, F) flattens to exactly pred[b] order -> free reshape.
    return out.reshape(B, 1)


if __name__ == "__main__":
    key = jax.random.PRNGKey(0)
    k_emb, k_w, k_b, k_emb2 = jax.random.split(key, 4)

    hidden_dim = 32
    # torch.nn.Linear default init: U(-1/sqrt(in_features), +1/sqrt(in_features))
    bound = 1.0 / (hidden_dim ** 0.5)
    weight = jax.random.uniform(k_w, (1, hidden_dim), jnp.float32, -bound, bound)
    bias = jax.random.uniform(k_b, (1,), jnp.float32, -bound, bound)

    # Case 1 (small, lane-folded, single full-extent block): B = 1000
    B1 = 1000
    emb1 = jax.random.normal(k_emb, (B1, hidden_dim), dtype=jnp.float32)
    pred1 = jax.block_until_ready(propensity_forward(emb1, weight, bias))
    ref1 = emb1 @ weight.T + bias
    assert pred1.shape == (B1, 1), pred1.shape
    assert jnp.allclose(pred1, ref1, atol=1e-3, rtol=1e-3), "mismatch (case 1)"

    # Case 2 (multi-tile grid with masked partial edge block, no padding copy)
    B2 = 20000
    emb2 = jax.random.normal(k_emb2, (B2, hidden_dim), dtype=jnp.float32)
    pred2 = jax.block_until_ready(propensity_forward(emb2, weight, bias))
    ref2 = emb2 @ weight.T + bias
    assert pred2.shape == (B2, 1), pred2.shape
    assert jnp.allclose(pred2, ref2, atol=1e-3, rtol=1e-3), "mismatch (case 2)"

    print("KERNEL_OK")
</pallas_src>

<mosaic_0001>
module attributes {stable_mosaic.version = 11 : i64} {
  func.func @propensity_kernel(%arg0: i32, %arg1: memref<250x128xf32, #tpu.memory_space<vmem>>, %arg2: memref<128x4xf32, #tpu.memory_space<vmem>>, %arg3: memref<1xf32, #tpu.memory_space<smem>>, %arg4: memref<250x4xf32, #tpu.memory_space<vmem>>) attributes {dimension_semantics = [#tpu.dimension_semantics<parallel>], iteration_bounds = array<i64: 1>, scalar_prefetch = 0 : i64, scratch_operands = 0 : i64, tpu.core_type = #tpu.core_type<tc>, window_params = [{transform_indices = @transform_0, window_bounds = array<i64: 250, 128>}, {pipeline_mode = #tpu.pipeline_mode<synchronous>, transform_indices = @transform_1, window_bounds = array<i64: 128, 4>}, {transform_indices = @transform_2, window_bounds = array<i64: 1>}, {transform_indices = @transform_3, window_bounds = array<i64: 250, 4>}]} {
    %c0 = arith.constant 0 : index
    %c0_0 = arith.constant 0 : index
    %0 = vector.load %arg1[%c0, %c0_0] : memref<250x128xf32, #tpu.memory_space<vmem>>, vector<250x128xf32>
    %c0_1 = arith.constant 0 : index
    %c0_2 = arith.constant 0 : index
    %1 = vector.load %arg2[%c0_1, %c0_2] : memref<128x4xf32, #tpu.memory_space<vmem>>, vector<128x4xf32>
    %cst = arith.constant dense<0.000000e+00> : vector<250x4xf32>
    %2 = tpu.matmul %0, %1, %cst {dimension_numbers = #tpu.dot_dimension_numbers<[1], [0], [0], [1], [0, 0, 1, 1], [], []>} : vector<250x128xf32>, vector<128x4xf32>, vector<250x4xf32> -> vector<250x4xf32>
    %c0_3 = arith.constant 0 : index
    %3 = memref.load %arg3[%c0_3] : memref<1xf32, #tpu.memory_space<smem>>
    %4 = vector.broadcast %3 : f32 to vector<250x4xf32>
    %5 = arith.addf %2, %4 : vector<250x4xf32>
    %c0_4 = arith.constant 0 : index
    %c0_5 = arith.constant 0 : index
    %6 = vector.load %arg4[%c0_4, %c0_5] : memref<250x4xf32, #tpu.memory_space<vmem>>, vector<250x4xf32>
    tpu.vector_store %arg4[%c0_4, %c0_5], %5 {strides = array<i32>} : memref<250x4xf32, #tpu.memory_space<vmem>>, vector<250x4xf32>,
    return
  }
  func.func @transform_0(%arg0: i32) -> (i32, i32) {
    %c0_i32 = arith.constant 0 : i32
    %c0_i32_0 = arith.constant 0 : i32
    return %arg0, %c0_i32 : i32, i32
  }
  func.func @transform_1(%arg0: i32) -> (i32, i32) {
    %c0_i32 = arith.constant 0 : i32
    %c0_i32_0 = arith.constant 0 : i32
    %c0_i32_1 = arith.constant 0 : i32
    return %c0_i32, %c0_i32_0 : i32, i32
  }
  func.func @transform_2(%arg0: i32) -> i32 {
    %c0_i32 = arith.constant 0 : i32
    %c0_i32_0 = arith.constant 0 : i32
    return %c0_i32 : i32
  }
  func.func @transform_3(%arg0: i32) -> (i32, i32) {
    %c0_i32 = arith.constant 0 : i32
    %c0_i32_0 = arith.constant 0 : i32
    return %arg0, %c0_i32 : i32, i32
  }
}

</mosaic_0001>

<llo_original>
// kernel: propensity_forward.1
$region0: #{propensity_forward.1}
  #allocation0 [shape = 'u32[]', space=smem, size = 0x4, offset = 0x4, fixed_abs, tag = 'smem constant byte address 0x4 - core index']
  #allocation1 [shape = 'u32[144,128]{1,0:T(1,128)}', space=vmem, size = 0x12000, scoped, tag = 'internal scratch']
  #allocation2 [shape = 'f32[1]{0:T(128)S(6)}', space=smem, size = 0x200, scoped, tag = 'scoped memory for propensity_forward.1']
  %s0 = inlined_call_operand.vmem [shape: f32[250,128], index: 0, kind: input, shape index: {}]
  %s1 = inlined_call_operand.vmem [shape: f32[128,4], index: 1, kind: input, shape index: {}]
  %s2 = inlined_call_operand.<no memory space> [shape: f32[1], index: 2, kind: input, shape index: {}]
  %s3 = inlined_call_operand.vmem [shape: f32[250,4], index: 3, kind: output, shape index: {}]
  %s4 = sld [smem:[#allocation0]]
  $region22: #{propensity_forward.1} parent=0
    _
  %s6 = ssub.s32 1, %s4
  %s7 = scalar_select 0, %s6, %s4
  %8 = sst [smem:[#allocation2]] %s2
  // Predicated region
  $region2: #{propensity_forward.1} parent=0 // pred_check
    _
  $region3: #{propensity_forward.1} parent=0 // pred_check_branch
    %10 = sbr.rel (0) target = $region5
  $region4: #{propensity_forward.1} parent=0 // pred_region
    _
  $region5: #{propensity_forward.1} parent=0 // pred_fallthru
    _
  // Predicated region
  $region6: #{propensity_forward.1} parent=0 // pred_check
    _
  $region7: #{propensity_forward.1} parent=0 // pred_check_branch
    %12 = sbr.rel (0) target = $region9
  $region8: #{propensity_forward.1} parent=0 // pred_region
    _
  $region9: #{propensity_forward.1} parent=0 // pred_fallthru
    _
  // Predicated region
  $region10: #{propensity_forward.1} parent=0 // pred_check
    _
  $region11: #{propensity_forward.1} parent=0 // pred_check_branch
    %14 = sbr.rel (0) target = $region13
  $region12: #{propensity_forward.1} parent=0 // pred_region
    _
  $region13: #{propensity_forward.1} parent=0 // pred_fallthru
    _
  %v15 = vld [vmem:[%s0] sm:$0xff]
  %v16 = vld [vmem:[%s0 + $0x8] sm:$0xff]
  %v17 = vld [vmem:[%s0 + $0x10] sm:$0xff]
  %v18 = vld [vmem:[%s0 + $0x18] sm:$0xff]
  %v19 = vld [vmem:[%s0 + $0x20] sm:$0xff]
  %v20 = vld [vmem:[%s0 + $0x28] sm:$0xff]
  %v21 = vld [vmem:[%s0 + $0x30] sm:$0xff]
  %v22 = vld [vmem:[%s0 + $0x38] sm:$0xff]
  %v23 = vld [vmem:[%s0 + $0x40] sm:$0xff]
  %v24 = vld [vmem:[%s0 + $0x48] sm:$0xff]
  %v25 = vld [vmem:[%s0 + $0x50] sm:$0xff]
  %v26 = vld [vmem:[%s0 + $0x58] sm:$0xff]
  %v27 = vld [vmem:[%s0 + $0x60] sm:$0xff]
  %v28 = vld [vmem:[%s0 + $0x68] sm:$0xff]
  %v29 = vld [vmem:[%s0 + $0x70] sm:$0xff]
  %v30 = vld [vmem:[%s0 + $0x78] sm:$0xff]
  %v31 = vld [vmem:[%s0 + $0x80] sm:$0xff]
  %v32 = vld [vmem:[%s0 + $0x88] sm:$0xff]
  %v33 = vld [vmem:[%s0 + $0x90] sm:$0xff]
  %v34 = vld [vmem:[%s0 + $0x98] sm:$0xff]
  %v35 = vld [vmem:[%s0 + $0xa0] sm:$0xff]
  %v36 = vld [vmem:[%s0 + $0xa8] sm:$0xff]
  %v37 = vld [vmem:[%s0 + $0xb0] sm:$0xff]
  %v38 = vld [vmem:[%s0 + $0xb8] sm:$0xff]
  %v39 = vld [vmem:[%s0 + $0xc0] sm:$0xff]
  %v40 = vld [vmem:[%s0 + $0xc8] sm:$0xff]
  %v41 = vld [vmem:[%s0 + $0xd0] sm:$0xff]
  %v42 = vld [vmem:[%s0 + $0xd8] sm:$0xff]
  %v43 = vld [vmem:[%s0 + $0xe0] sm:$0xff]
  %v44 = vld [vmem:[%s0 + $0xe8] sm:$0xff]
  %v45 = vld [vmem:[%s0 + $0xf0] sm:$0xff]
  %v46 = vld [vmem:[%s0 + $0xf8] sm:$0x3]
  %v47 = vld [vmem:[%s1] sm:$0xff]
  %v48 = vld [vmem:[%s1 + $0x8] sm:$0xff]
  %v49 = vld [vmem:[%s1 + $0x10] sm:$0xff]
  %v50 = vld [vmem:[%s1 + $0x18] sm:$0xff]
  %v51 = vld [vmem:[%s1 + $0x20] sm:$0xff]
  %v52 = vld [vmem:[%s1 + $0x28] sm:$0xff]
  %v53 = vld [vmem:[%s1 + $0x30] sm:$0xff]
  %v54 = vld [vmem:[%s1 + $0x38] sm:$0xff]
  %v55 = vld [vmem:[%s1 + $0x40] sm:$0xff]
  %v56 = vld [vmem:[%s1 + $0x48] sm:$0xff]
  %v57 = vld [vmem:[%s1 + $0x50] sm:$0xff]
  %v58 = vld [vmem:[%s1 + $0x58] sm:$0xff]
  %v59 = vld [vmem:[%s1 + $0x60] sm:$0xff]
  %v60 = vld [vmem:[%s1 + $0x68] sm:$0xff]
  %v61 = vld [vmem:[%s1 + $0x70] sm:$0xff]
  %v62 = vld [vmem:[%s1 + $0x78] sm:$0xff]
  %s63 = sld [smem:[#allocation2]]
  %v64 = vstv %s63
  %65 = vmatprep.subr.mxu0 0.0
  %66 = vmatpush1.msra.mxu0 %v47
  %67 = vmatprep.subr.mxu0 0.0
  %68 = vmatpush1.msra.mxu0 %v48
  %69 = vmatprep.subr.mxu0 0.0
  %70 = vmatpush1.msra.mxu0 %v49
  %71 = vmatprep.subr.mxu0 0.0
  %72 = vmatpush1.msra.mxu0 %v50
  %73 = vmatprep.subr.mxu0 0.0
  %74 = vmatpush1.msra.mxu0 %v51
  %75 = vmatprep.subr.mxu0 0.0
  %76 = vmatpush1.msra.mxu0 %v52
  %77 = vmatprep.subr.mxu0 0.0
  %78 = vmatpush1.msra.mxu0 %v53
  %79 = vmatprep.subr.mxu0 0.0
  %80 = vmatpush1.msra.mxu0 %v54
  %81 = vmatprep.subr.mxu0 0.0
  %82 = vmatpush1.msra.mxu0 %v55
  %83 = vmatprep.subr.mxu0 0.0
  %84 = vmatpush1.msra.mxu0 %v56
  %85 = vmatprep.subr.mxu0 0.0
  %86 = vmatpush1.msra.mxu0 %v57
  %87 = vmatprep.subr.mxu0 0.0
  %88 = vmatpush1.msra.mxu0 %v58
  %89 = vmatprep.subr.mxu0 0.0
  %90 = vmatpush1.msra.mxu0 %v59
  %91 = vmatprep.subr.mxu0 0.0
  %92 = vmatpush1.msra.mxu0 %v60
  %93 = vmatprep.subr.mxu0 0.0
  %94 = vmatpush1.msra.mxu0 %v61
  %95 = vmatprep.subr.mxu0 0.0
  %96 = vmatpush1.msra.mxu0 %v62
  %97 = vmatprep.subr.mxu0 0.0
  %98 = vmatpush1.msra.mxu0 0.0
  %99 = vmatprep.subr.mxu0 0.0
  %100 = vmatpush1.msra.mxu0 0.0
  %101 = vmatprep.subr.mxu0 0.0
  %102 = vmatpush1.msra.mxu0 0.0
  %103 = vmatprep.subr.mxu0 0.0
  %104 = vmatpush1.msra.mxu0 0.0
  %105 = vmatprep.subr.mxu0 0.0
  %106 = vmatpush1.msra.mxu0 0.0
  %107 = vmatprep.subr.mxu0 0.0
  %108 = vmatpush1.msra.mxu0 0.0
  %109 = vmatprep.subr.mxu0 0.0
  %110 = vmatpush1.msra.mxu0 0.0
  %111 = vmatprep.subr.mxu0 0.0
  %112 = vmatpush1.msra.mxu0 0.0
  %113 = vmatprep.subr.mxu0 0.0
  %114 = vmatpush1.msra.mxu0 0.0
  %115 = vmatprep.subr.mxu0 0.0
  %116 = vmatpush1.msra.mxu0 0.0
  %117 = vmatprep.subr.mxu0 0.0
  %118 = vmatpush1.msra.mxu0 0.0
  %119 = vmatprep.subr.mxu0 0.0
  %120 = vmatpush1.msra.mxu0 0.0
  %121 = vmatprep.subr.mxu0 0.0
  %122 = vmatpush1.msra.mxu0 0.0
  %123 = vmatprep.subr.mxu0 0.0
  %124 = vmatpush1.msra.mxu0 0.0
  %125 = vmatprep.subr.mxu0 0.0
  %126 = vmatpush1.msra.mxu0 0.0
  %127 = vmatprep.subr.mxu0 0.0
  %128 = vmatpush1.msra.mxu0 0.0
  %129 = vmatprep.mubr.f32.mxu0 0.0
  %130 = vmatmul.mubr.f32.gmra.mrb[0].mxu0 %v15
  %v131 = vpop.f32.mrb[0].mxu0
  %v132 = vadd.f32 %v64, %v131
  %v133 = vpop.f32.mrb[0].mxu0
  %134 = vmatprep.mubr.f32.mxu0 0.0
  %135 = vmatmul.mubr.f32.gmra.mrb[0].mxu0 %v16
  %v136 = vpop.f32.mrb[0].mxu0
  %v137 = vadd.f32 %v64, %v136
  %v138 = vpop.f32.mrb[0].mxu0
  %139 = vmatprep.mubr.f32.mxu0 0.0
  %140 = vmatmul.mubr.f32.gmra.mrb[0].mxu0 %v17
  %v141 = vpop.f32.mrb[0].mxu0
  %v142 = vadd.f32 %v64, %v141
  %v143 = vpop.f32.mrb[0].mxu0
  %144 = vmatprep.mubr.f32.mxu0 0.0
  %145 = vmatmul.mubr.f32.gmra.mrb[0].mxu0 %v18
  %v146 = vpop.f32.mrb[0].mxu0
  %v147 = vadd.f32 %v64, %v146
  %v148 = vpop.f32.mrb[0].mxu0
  %149 = vmatprep.mubr.f32.mxu0 0.0
  %150 = vmatmul.mubr.f32.gmra.mrb[0].mxu0 %v19
  %v151 = vpop.f32.mrb[0].mxu0
  %v152 = vadd.f32 %v64, %v151
  %v153 = vpop.f32.mrb[0].mxu0
  %154 = vmatprep.mubr.f32.mxu0 0.0
  %155 = vmatmul.mubr.f32.gmra.mrb[0].mxu0 %v20
  %v156 = vpop.f32.mrb[0].mxu0
  %v157 = vadd.f32 %v64, %v156
  %v158 = vpop.f32.mrb[0].mxu0
  %159 = vmatprep.mubr.f32.mxu0 0.0
  %160 = vmatmul.mubr.f32.gmra.mrb[0].mxu0 %v21
  %v161 = vpop.f32.mrb[0].mxu0
  %v162 = vadd.f32 %v64, %v161
  %v163 = vpop.f32.mrb[0].mxu0
  %164 = vmatprep.mubr.f32.mxu0 0.0
  %165 = vmatmul.mubr.f32.gmra.mrb[0].mxu0 %v22
  %v166 = vpop.f32.mrb[0].mxu0
  %v167 = vadd.f32 %v64, %v166
  %v168 = vpop.f32.mrb[0].mxu0
  %169 = vmatprep.mubr.f32.mxu0 0.0
  %170 = vmatmul.mubr.f32.gmra.mrb[0].mxu0 %v23
  %v171 = vpop.f32.mrb[0].mxu0
  %v172 = vadd.f32 %v64, %v171
  %v173 = vpop.f32.mrb[0].mxu0
  %174 = vmatprep.mubr.f32.mxu0 0.0
  %175 = vmatmul.mubr.f32.gmra.mrb[0].mxu0 %v24
  %v176 = vpop.f32.mrb[0].mxu0
  %v177 = vadd.f32 %v64, %v176
  %v178 = vpop.f32.mrb[0].mxu0
  %179 = vmatprep.mubr.f32.mxu0 0.0
  %180 = vmatmul.mubr.f32.gmra.mrb[0].mxu0 %v25
  %v181 = vpop.f32.mrb[0].mxu0
  %v182 = vadd.f32 %v64, %v181
  %v183 = vpop.f32.mrb[0].mxu0
  %184 = vmatprep.mubr.f32.mxu0 0.0
  %185 = vmatmul.mubr.f32.gmra.mrb[0].mxu0 %v26
  %v186 = vpop.f32.mrb[0].mxu0
  %v187 = vadd.f32 %v64, %v186
  %v188 = vpop.f32.mrb[0].mxu0
  %189 = vmatprep.mubr.f32.mxu0 0.0
  %190 = vmatmul.mubr.f32.gmra.mrb[0].mxu0 %v27
  %v191 = vpop.f32.mrb[0].mxu0
  %v192 = vadd.f32 %v64, %v191
  %v193 = vpop.f32.mrb[0].mxu0
  %194 = vmatprep.mubr.f32.mxu0 0.0
  %195 = vmatmul.mubr.f32.gmra.mrb[0].mxu0 %v28
  %v196 = vpop.f32.mrb[0].mxu0
  %v197 = vadd.f32 %v64, %v196
  %v198 = vpop.f32.mrb[0].mxu0
  %199 = vmatprep.mubr.f32.mxu0 0.0
  %200 = vmatmul.mubr.f32.gmra.mrb[0].mxu0 %v29
  %v201 = vpop.f32.mrb[0].mxu0
  %v202 = vadd.f32 %v64, %v201
  %v203 = vpop.f32.mrb[0].mxu0
  %204 = vmatprep.mubr.f32.mxu0 0.0
  %205 = vmatmul.mubr.f32.gmra.mrb[0].mxu0 %v30
  %v206 = vpop.f32.mrb[0].mxu0
  %v207 = vadd.f32 %v64, %v206
  %v208 = vpop.f32.mrb[0].mxu0
  %209 = vmatprep.mubr.f32.mxu0 0.0
  %210 = vmatmul.mubr.f32.gmra.mrb[0].mxu0 %v31
  %v211 = vpop.f32.mrb[0].mxu0
  %v212 = vadd.f32 %v64, %v211
  %v213 = vpop.f32.mrb[0].mxu0
  %214 = vmatprep.mubr.f32.mxu0 0.0
  %215 = vmatmul.mubr.f32.gmra.mrb[0].mxu0 %v32
  %v216 = vpop.f32.mrb[0].mxu0
  %v217 = vadd.f32 %v64, %v216
  %v218 = vpop.f32.mrb[0].mxu0
  %219 = vmatprep.mubr.f32.mxu0 0.0
  %220 = vmatmul.mubr.f32.gmra.mrb[0].mxu0 %v33
  %v221 = vpop.f32.mrb[0].mxu0
  %v222 = vadd.f32 %v64, %v221
  %v223 = vpop.f32.mrb[0].mxu0
  %224 = vmatprep.mubr.f32.mxu0 0.0
  %225 = vmatmul.mubr.f32.gmra.mrb[0].mxu0 %v34
  %v226 = vpop.f32.mrb[0].mxu0
  %v227 = vadd.f32 %v64, %v226
  %v228 = vpop.f32.mrb[0].mxu0
  %229 = vmatprep.mubr.f32.mxu0 0.0
  %230 = vmatmul.mubr.f32.gmra.mrb[0].mxu0 %v35
  %v231 = vpop.f32.mrb[0].mxu0
  %v232 = vadd.f32 %v64, %v231
  %v233 = vpop.f32.mrb[0].mxu0
  %234 = vmatprep.mubr.f32.mxu0 0.0
  %235 = vmatmul.mubr.f32.gmra.mrb[0].mxu0 %v36
  %v236 = vpop.f32.mrb[0].mxu0
  %v237 = vadd.f32 %v64, %v236
  %v238 = vpop.f32.mrb[0].mxu0
  %239 = vmatprep.mubr.f32.mxu0 0.0
  %240 = vmatmul.mubr.f32.gmra.mrb[0].mxu0 %v37
  %v241 = vpop.f32.mrb[0].mxu0
  %v242 = vadd.f32 %v64, %v241
  %v243 = vpop.f32.mrb[0].mxu0
  %244 = vmatprep.mubr.f32.mxu0 0.0
  %245 = vmatmul.mubr.f32.gmra.mrb[0].mxu0 %v38
  %v246 = vpop.f32.mrb[0].mxu0
  %v247 = vadd.f32 %v64, %v246
  %v248 = vpop.f32.mrb[0].mxu0
  %249 = vmatprep.mubr.f32.mxu0 0.0
  %250 = vmatmul.mubr.f32.gmra.mrb[0].mxu0 %v39
  %v251 = vpop.f32.mrb[0].mxu0
  %v252 = vadd.f32 %v64, %v251
  %v253 = vpop.f32.mrb[0].mxu0
  %254 = vmatprep.mubr.f32.mxu0 0.0
  %255 = vmatmul.mubr.f32.gmra.mrb[0].mxu0 %v40
  %v256 = vpop.f32.mrb[0].mxu0
  %v257 = vadd.f32 %v64, %v256
  %v258 = vpop.f32.mrb[0].mxu0
  %259 = vmatprep.mubr.f32.mxu0 0.0
  %260 = vmatmul.mubr.f32.gmra.mrb[0].mxu0 %v41
  %v261 = vpop.f32.mrb[0].mxu0
  %v262 = vadd.f32 %v64, %v261
  %v263 = vpop.f32.mrb[0].mxu0
  %264 = vmatprep.mubr.f32.mxu0 0.0
  %265 = vmatmul.mubr.f32.gmra.mrb[0].mxu0 %v42
  %v266 = vpop.f32.mrb[0].mxu0
  %v267 = vadd.f32 %v64, %v266
  %v268 = vpop.f32.mrb[0].mxu0
  %269 = vmatprep.mubr.f32.mxu0 0.0
  %270 = vmatmul.mubr.f32.gmra.mrb[0].mxu0 %v43
  %v271 = vpop.f32.mrb[0].mxu0
  %v272 = vadd.f32 %v64, %v271
  %v273 = vpop.f32.mrb[0].mxu0
  %274 = vmatprep.mubr.f32.mxu0 0.0
  %275 = vmatmul.mubr.f32.gmra.mrb[0].mxu0 %v44
  %v276 = vpop.f32.mrb[0].mxu0
  %v277 = vadd.f32 %v64, %v276
  %v278 = vpop.f32.mrb[0].mxu0
  %279 = vmatprep.mubr.f32.mxu0 0.0
  %280 = vmatmul.mubr.f32.gmra.mrb[0].mxu0 %v45
  %v281 = vpop.f32.mrb[0].mxu0
  %v282 = vadd.f32 %v64, %v281
  %v283 = vpop.f32.mrb[0].mxu0
  %284 = vmatprep.mubr.f32.mxu0 0.0
  %285 = vmatmul.mubr.f32.gmra.mrb[0].mxu0 %v46
  %v286 = vpop.f32.mrb[0].mxu0
  %v287 = vadd.f32 %v64, %v286
  %v288 = vpop.f32.mrb[0].mxu0
  %289 = vdwg.mxu0
  %vm290 = vcmask 31744
  %291 = vst.msk [vmem:[%s3] sm:$0xff] %vm290, %v132
  %292 = vst.msk [vmem:[%s3 + $0x8] sm:$0xff] %vm290, %v137
  %293 = vst.msk [vmem:[%s3 + $0x10] sm:$0xff] %vm290, %v142
  %294 = vst.msk [vmem:[%s3 + $0x18] sm:$0xff] %vm290, %v147
  %295 = vst.msk [vmem:[%s3 + $0x20] sm:$0xff] %vm290, %v152
  %296 = vst.msk [vmem:[%s3 + $0x28] sm:$0xff] %vm290, %v157
  %297 = vst.msk [vmem:[%s3 + $0x30] sm:$0xff] %vm290, %v162
  %298 = vst.msk [vmem:[%s3 + $0x38] sm:$0xff] %vm290, %v167
  %299 = vst.msk [vmem:[%s3 + $0x40] sm:$0xff] %vm290, %v172
  %300 = vst.msk [vmem:[%s3 + $0x48] sm:$0xff] %vm290, %v177
  %301 = vst.msk [vmem:[%s3 + $0x50] sm:$0xff] %vm290, %v182
  %302 = vst.msk [vmem:[%s3 + $0x58] sm:$0xff] %vm290, %v187
  %303 = vst.msk [vmem:[%s3 + $0x60] sm:$0xff] %vm290, %v192
  %304 = vst.msk [vmem:[%s3 + $0x68] sm:$0xff] %vm290, %v197
  %305 = vst.msk [vmem:[%s3 + $0x70] sm:$0xff] %vm290, %v202
  %306 = vst.msk [vmem:[%s3 + $0x78] sm:$0xff] %vm290, %v207
  %307 = vst.msk [vmem:[%s3 + $0x80] sm:$0xff] %vm290, %v212
  %308 = vst.msk [vmem:[%s3 + $0x88] sm:$0xff] %vm290, %v217
  %309 = vst.msk [vmem:[%s3 + $0x90] sm:$0xff] %vm290, %v222
  %310 = vst.msk [vmem:[%s3 + $0x98] sm:$0xff] %vm290, %v227
  %311 = vst.msk [vmem:[%s3 + $0xa0] sm:$0xff] %vm290, %v232
  %312 = vst.msk [vmem:[%s3 + $0xa8] sm:$0xff] %vm290, %v237
  %313 = vst.msk [vmem:[%s3 + $0xb0] sm:$0xff] %vm290, %v242
  %314 = vst.msk [vmem:[%s3 + $0xb8] sm:$0xff] %vm290, %v247
  %315 = vst.msk [vmem:[%s3 + $0xc0] sm:$0xff] %vm290, %v252
  %316 = vst.msk [vmem:[%s3 + $0xc8] sm:$0xff] %vm290, %v257
  %317 = vst.msk [vmem:[%s3 + $0xd0] sm:$0xff] %vm290, %v262
  %318 = vst.msk [vmem:[%s3 + $0xd8] sm:$0xff] %vm290, %v267
  %319 = vst.msk [vmem:[%s3 + $0xe0] sm:$0xff] %vm290, %v272
  %320 = vst.msk [vmem:[%s3 + $0xe8] sm:$0xff] %vm290, %v277
  %321 = vst.msk [vmem:[%s3 + $0xf0] sm:$0xff] %vm290, %v282
  %vm322 = vcmask 25600
  %323 = vst.msk [vmem:[%s3 + $0xf8] sm:$0x3] %vm322, %v287
  // Predicated region
  $region14: #{propensity_forward.1} parent=0 // pred_check
    _
  $region15: #{propensity_forward.1} parent=0 // pred_check_branch
    %325 = sbr.rel (0) target = $region17
  $region16: #{propensity_forward.1} parent=0 // pred_region
    _
  $region17: #{propensity_forward.1} parent=0 // pred_fallthru
    _
  // Predicated region
  $region18: #{propensity_forward.1} parent=0 // pred_check
    _
  $region19: #{propensity_forward.1} parent=0 // pred_check_branch
    %327 = sbr.rel (0) target = $region21
  $region20: #{propensity_forward.1} parent=0 // pred_region
    _
  $region21: #{propensity_forward.1} parent=0 // pred_fallthru
    _

</llo_original>
